<compile_context>
chip_gen: v7x
topology: tpu7x:2x2x1
jax: 0.10.0
libtpu: 0.0.40
codegen_flags: <defaults>
</compile_context>

<pallas_src>
import functools

import jax
import jax.numpy as jnp
import numpy as np
from jax.experimental import pallas as pl
from jax.experimental.pallas import tpu as pltpu


# ----------------------------------------------------------------------------
# Pallas kernel
# ----------------------------------------------------------------------------
def ltq_kernel(thr_ref, sc_ref, x_ref, o_ref):
    """LTQ forward on one [TM, LANE] tile.

    thr_ref: SMEM [n_val]    strictly-increasing forward thresholds
    sc_ref:  SMEM [2]        = [scale1, interval * scale2]
    x_ref:   VMEM [TM, LANE] input tile
    o_ref:   VMEM [TM, LANE] output tile
    """
    x = x_ref[...] * sc_ref[0]                       # x * scale1
    n_val = thr_ref.shape[0]                         # static, small (2^b - 1)
    cnt = jnp.zeros_like(x)
    for i in range(n_val):                           # unrolled VPU compares
        cnt = cnt + (x > thr_ref[i]).astype(jnp.float32)
    # x_forward = interval * cnt ;  out = x_forward * scale2  (fused scalar)
    o_ref[...] = cnt * sc_ref[1]


# ----------------------------------------------------------------------------
# Wrapper
# ----------------------------------------------------------------------------
def _round_up(v, m):
    return (v + m - 1) // m * m


@functools.partial(jax.jit,
                   static_argnames=("num_bits", "eps", "lane", "max_tile_rows"))
def ltq_forward(x, start, a, scale1, scale2, num_bits, *, eps=1e-3,
                lane=512, max_tile_rows=512):
    """Apply LTQ elementwise to `x` (any shape) via a tiled Pallas kernel."""
    n_val = 2 ** num_bits - 1
    interval = 2.0 / n_val

    # --- precompute forward thresholds (tiny glue, fused under jit) ---
    a = jnp.asarray(a, jnp.float32)
    eps_f = jnp.float32(eps)
    a_pos = jnp.where(a > eps_f, a, eps_f)
    # thr[i] = start + sum_{j<i} a_pos[j] + a_pos[i]/2   (strictly increasing)
    thr = (jnp.asarray(start, jnp.float32).reshape(())
           + jnp.cumsum(a_pos) - 0.5 * a_pos).astype(jnp.float32)
    sc = jnp.stack([jnp.asarray(scale1, jnp.float32).reshape(()),
                    jnp.float32(interval)
                    * jnp.asarray(scale2, jnp.float32).reshape(())])

    # --- layout plumbing: lane-dense [rows_pad, lane] slab, TM-row tiles ---
    orig_shape = x.shape
    total = x.size
    lane = min(lane, _round_up(total, 128))          # multiple of 128
    rows = pl.cdiv(total, lane)
    tm = min(max_tile_rows, _round_up(rows, 8))      # multiple of 8
    rows_pad = _round_up(rows, tm)

    x_flat = x.reshape(-1).astype(jnp.float32)
    x2d = jnp.pad(x_flat, (0, rows_pad * lane - total)).reshape(rows_pad, lane)

    out2d = pl.pallas_call(
        ltq_kernel,
        out_shape=jax.ShapeDtypeStruct((rows_pad, lane), jnp.float32),
        grid=(rows_pad // tm,),
        in_specs=[
            pl.BlockSpec(memory_space=pltpu.MemorySpace.SMEM),   # thresholds
            pl.BlockSpec(memory_space=pltpu.MemorySpace.SMEM),   # fused scalars
            pl.BlockSpec((tm, lane), lambda i: (i, 0)),          # x tile
        ],
        out_specs=pl.BlockSpec((tm, lane), lambda i: (i, 0)),
        compiler_params=pltpu.CompilerParams(
            dimension_semantics=("parallel",)),
    )(thr, sc, x2d)

    return out2d.reshape(-1)[:total].reshape(orig_shape)


# ----------------------------------------------------------------------------
# Pure-JAX reference (mirrors the PyTorch forward literally)
# ----------------------------------------------------------------------------
def ltq_reference(x, start, a, scale1, scale2, num_bits, eps=1e-3):
    n_val = 2 ** num_bits - 1
    interval = 2.0 / n_val
    xs = x * scale1
    a_pos = jnp.where(a > eps, a, eps)
    x_forward = xs
    step_right = 0.0
    thre_forward = start + a_pos[0] / 2
    for i in range(n_val):
        step_right = step_right + interval
        if i == 0:
            x_forward = jnp.where(xs > thre_forward, step_right, 0.0)
        else:
            thre_forward = thre_forward + a_pos[i - 1] / 2 + a_pos[i] / 2
            x_forward = jnp.where(xs > thre_forward, step_right, x_forward)
    # out = x_forward.detach() + x_backward - x_backward.detach() == x_forward
    return x_forward * scale2


# ----------------------------------------------------------------------------
if __name__ == "__main__":
    num_bits = 2
    n_val = 2 ** num_bits - 1
    interval = 2.0 / n_val

    key = jax.random.PRNGKey(0)
    kx, ka, ks, k1, k2, kbig = jax.random.split(key, 6)

    # Deterministic LTQ parameters (match PyTorch init, slightly perturbed).
    start = jnp.float32(0.0) + jax.random.uniform(ks, (), jnp.float32, -0.05, 0.05)
    a = jnp.full((n_val,), interval, jnp.float32) + \
        jax.random.uniform(ka, (n_val,), jnp.float32, -0.05, 0.05)
    scale1 = jnp.float32(1.0) + jax.random.uniform(k1, (), jnp.float32, -0.1, 0.1)
    scale2 = jnp.float32(1.0) + jax.random.uniform(k2, (), jnp.float32, -0.1, 0.1)

    # Small test: single tile.
    x = jax.random.normal(kx, (2, 4, 16, 16), jnp.float32)
    out = ltq_forward(x, start, a, scale1, scale2, num_bits)
    out = jax.block_until_ready(out)
    ref = ltq_reference(x, start, a, scale1, scale2, num_bits)
    assert out.shape == x.shape, out.shape
    np.testing.assert_allclose(np.asarray(out), np.asarray(ref),
                               atol=1e-5, rtol=1e-5)

    # Larger test: exercises a multi-tile grid (parallel axis, pipelined DMA).
    x_big = jax.random.normal(kbig, (8, 64, 32, 32), jnp.float32)
    out_big = ltq_forward(x_big, start, a, scale1, scale2, num_bits)
    out_big = jax.block_until_ready(out_big)
    ref_big = ltq_reference(x_big, start, a, scale1, scale2, num_bits)
    np.testing.assert_allclose(np.asarray(out_big), np.asarray(ref_big),
                               atol=1e-5, rtol=1e-5)

    print("KERNEL_OK")
</pallas_src>

<mosaic_0001>
module attributes {stable_mosaic.version = 11 : i64} {
  func.func @ltq_kernel(%arg0: i32, %arg1: memref<3xf32, #tpu.memory_space<smem>>, %arg2: memref<2xf32, #tpu.memory_space<smem>>, %arg3: memref<8x512xf32, #tpu.memory_space<vmem>>, %arg4: memref<8x512xf32, #tpu.memory_space<vmem>>) attributes {dimension_semantics = [#tpu.dimension_semantics<parallel>], iteration_bounds = array<i64: 1>, scalar_prefetch = 0 : i64, scratch_operands = 0 : i64, tpu.core_type = #tpu.core_type<tc>, window_params = [{transform_indices = @transform_0, window_bounds = array<i64: 3>}, {transform_indices = @transform_1, window_bounds = array<i64: 2>}, {transform_indices = @transform_2, window_bounds = array<i64: 8, 512>}, {transform_indices = @transform_3, window_bounds = array<i64: 8, 512>}]} {
    %c0 = arith.constant 0 : index
    %c0_0 = arith.constant 0 : index
    %0 = vector.load %arg3[%c0, %c0_0] : memref<8x512xf32, #tpu.memory_space<vmem>>, vector<8x512xf32>
    %c0_1 = arith.constant 0 : index
    %1 = memref.load %arg2[%c0_1] : memref<2xf32, #tpu.memory_space<smem>>
    %2 = vector.broadcast %1 : f32 to vector<8x512xf32>
    %3 = arith.mulf %0, %2 : vector<8x512xf32>
    %cst = arith.constant 0.000000e+00 : f32
    %4 = vector.broadcast %cst : f32 to vector<8x512xf32>
    %c0_2 = arith.constant 0 : index
    %5 = memref.load %arg1[%c0_2] : memref<3xf32, #tpu.memory_space<smem>>
    %6 = vector.broadcast %5 : f32 to vector<8x512xf32>
    %7 = arith.cmpf ogt, %3, %6 : vector<8x512xf32>
    %8 = arith.extui %7 : vector<8x512xi1> to vector<8x512xi32>
    %9 = arith.sitofp %8 : vector<8x512xi32> to vector<8x512xf32>
    %10 = arith.addf %4, %9 : vector<8x512xf32>
    %c1 = arith.constant 1 : index
    %11 = memref.load %arg1[%c1] : memref<3xf32, #tpu.memory_space<smem>>
    %12 = vector.broadcast %11 : f32 to vector<8x512xf32>
    %13 = arith.cmpf ogt, %3, %12 : vector<8x512xf32>
    %14 = arith.extui %13 : vector<8x512xi1> to vector<8x512xi32>
    %15 = arith.sitofp %14 : vector<8x512xi32> to vector<8x512xf32>
    %16 = arith.addf %10, %15 : vector<8x512xf32>
    %c2 = arith.constant 2 : index
    %17 = memref.load %arg1[%c2] : memref<3xf32, #tpu.memory_space<smem>>
    %18 = vector.broadcast %17 : f32 to vector<8x512xf32>
    %19 = arith.cmpf ogt, %3, %18 : vector<8x512xf32>
    %20 = arith.extui %19 : vector<8x512xi1> to vector<8x512xi32>
    %21 = arith.sitofp %20 : vector<8x512xi32> to vector<8x512xf32>
    %22 = arith.addf %16, %21 : vector<8x512xf32>
    %c1_3 = arith.constant 1 : index
    %23 = memref.load %arg2[%c1_3] : memref<2xf32, #tpu.memory_space<smem>>
    %24 = vector.broadcast %23 : f32 to vector<8x512xf32>
    %25 = arith.mulf %22, %24 : vector<8x512xf32>
    %c0_4 = arith.constant 0 : index
    %c0_5 = arith.constant 0 : index
    %26 = vector.load %arg4[%c0_4, %c0_5] : memref<8x512xf32, #tpu.memory_space<vmem>>, vector<8x512xf32>
    tpu.vector_store %arg4[%c0_4, %c0_5], %25 {strides = array<i32>} : memref<8x512xf32, #tpu.memory_space<vmem>>, vector<8x512xf32>,
    return
  }
  func.func @transform_0(%arg0: i32) -> i32 {
    %c0_i32 = arith.constant 0 : i32
    %c0_i32_0 = arith.constant 0 : i32
    return %c0_i32 : i32
  }
  func.func @transform_1(%arg0: i32) -> i32 {
    %c0_i32 = arith.constant 0 : i32
    %c0_i32_0 = arith.constant 0 : i32
    return %c0_i32 : i32
  }
  func.func @transform_2(%arg0: i32) -> (i32, i32) {
    %c0_i32 = arith.constant 0 : i32
    %c0_i32_0 = arith.constant 0 : i32
    return %arg0, %c0_i32 : i32, i32
  }
  func.func @transform_3(%arg0: i32) -> (i32, i32) {
    %c0_i32 = arith.constant 0 : i32
    %c0_i32_0 = arith.constant 0 : i32
    return %arg0, %c0_i32 : i32, i32
  }
}

</mosaic_0001>

<llo_original>
// kernel: ltq_forward.1
$region0: #{ltq_forward.1}
  #allocation0 [shape = 'u32[]', space=smem, size = 0x4, offset = 0x4, fixed_abs, tag = 'smem constant byte address 0x4 - core index']
  #allocation1 [shape = 'u32[144,128]{1,0:T(1,128)}', space=vmem, size = 0x12000, scoped, tag = 'internal scratch']
  %s0 = inlined_call_operand.vmem [shape: f32[3], index: 0, kind: input, shape index: {}]
  %s1 = inlined_call_operand.vmem [shape: f32[2], index: 1, kind: input, shape index: {}]
  %s2 = inlined_call_operand.vmem [shape: f32[8,512], index: 2, kind: input, shape index: {}]
  %s3 = inlined_call_operand.vmem [shape: f32[8,512], index: 3, kind: output, shape index: {}]
  %s4 = sld [smem:[#allocation0]]
  $region30: #{ltq_forward.1} parent=0
    _
  %s6 = ssub.s32 1, %s4
  %s7 = scalar_select 0, %s6, %s4
  $region1: #{ltq_forward.1} parent=0
    #allocation2 [shape = 'u8[512]{0}', space=smem, size = 0x200, scoped, tag = 'input window, operand 0, single buffered']
    #allocation3 [shape = 's32[1]{0}', space=sflag, size = 0x4, scoped, tag = 'scoped memory for ltq_forward.1']
    #allocation4 [shape = 'u8[512]{0}', space=smem, size = 0x200, scoped, tag = 'input window, operand 1, single buffered']
    #allocation5 [shape = 's32[1]{0}', space=sflag, size = 0x4, scoped, tag = 'scoped memory for ltq_forward.1']
    %8 = vsyncpa [#allocation3], 0
    %9 = vsyncpa [#allocation5], 0
    // Predicated region
    $region2: #{ltq_forward.1} parent=1 // pred_check
      _
    $region3: #{ltq_forward.1} parent=1 // pred_check_branch
      %11 = sbr.rel (0) target = $region5
    $region4: #{ltq_forward.1} parent=1 // pred_region
      %s13 = ssub.s32 16, 16
      %14 = vsyncadd [#allocation3], %s13
      %s16 = sshll.u32 %s0, 4
      %s17 = int_to_ptr.vmem [resolvable:$true] %s16
      %19 = dma.vmem_to_smem %s17, 16, [#allocation2], [#allocation3]
    $region5: #{ltq_forward.1} parent=1 // pred_fallthru
      _
    // Predicated region
    $region6: #{ltq_forward.1} parent=1 // pred_check
      _
    $region7: #{ltq_forward.1} parent=1 // pred_check_branch
      %21 = sbr.rel (0) target = $region9
    $region8: #{ltq_forward.1} parent=1 // pred_region
      %s23 = ssub.s32 16, 16
      %24 = vsyncadd [#allocation5], %s23
      %s26 = sshll.u32 %s1, 4
      %s27 = int_to_ptr.vmem [resolvable:$true] %s26
      %29 = dma.vmem_to_smem %s27, 16, [#allocation4], [#allocation5]
    $region9: #{ltq_forward.1} parent=1 // pred_fallthru
      _
    // Predicated region
    $region10: #{ltq_forward.1} parent=1 // pred_check
      _
    $region11: #{ltq_forward.1} parent=1 // pred_check_branch
      %31 = sbr.rel (0) target = $region13
    $region12: #{ltq_forward.1} parent=1 // pred_region
      _
    $region13: #{ltq_forward.1} parent=1 // pred_fallthru
      _
    // Predicated region
    $region14: #{ltq_forward.1} parent=1 // pred_check
      _
    $region15: #{ltq_forward.1} parent=1 // pred_check_branch
      %33 = sbr.rel (0) target = $region17
    $region16: #{ltq_forward.1} parent=1 // pred_region
      %34 = dma.done [#allocation3], 16
    $region17: #{ltq_forward.1} parent=1 // pred_fallthru
      _
    // Predicated region
    $region18: #{ltq_forward.1} parent=1 // pred_check
      _
    $region19: #{ltq_forward.1} parent=1 // pred_check_branch
      %36 = sbr.rel (0) target = $region21
    $region20: #{ltq_forward.1} parent=1 // pred_region
      %37 = dma.done [#allocation5], 16
    $region21: #{ltq_forward.1} parent=1 // pred_fallthru
      _
    %38 = sfence
    %v39 = vld [vmem:[%s2] sm:$0xff]
    %v40 = vld [vmem:[%s2 + $0x8] sm:$0xff]
    %v41 = vld [vmem:[%s2 + $0x10] sm:$0xff]
    %v42 = vld [vmem:[%s2 + $0x18] sm:$0xff]
    %s43 = sld [smem:[#allocation4]]
    %v44 = vstv %s43
    %v45 = vmul.f32 %v39, %v44
    %v46 = vmul.f32 %v40, %v44
    %v47 = vmul.f32 %v41, %v44
    %v48 = vmul.f32 %v42, %v44
    %s49 = sld [smem:[#allocation2]]
    %v50 = vstv %s49
    %vm51 = vcmp.gt.f32.partialorder %v45, %v50
    %vm52 = vcmp.gt.f32.partialorder %v46, %v50
    %vm53 = vcmp.gt.f32.partialorder %v47, %v50
    %vm54 = vcmp.gt.f32.partialorder %v48, %v50
    %v55 = vsel %vm51, 1, 0
    %v56 = vsel %vm52, 1, 0
    %v57 = vsel %vm53, 1, 0
    %v58 = vsel %vm54, 1, 0
    %v59 = vcvt.s32.f32 %v55
    %v60 = vcvt.s32.f32 %v56
    %v61 = vcvt.s32.f32 %v57
    %v62 = vcvt.s32.f32 %v58
    %v63 = vadd.f32 %v59, 0.0
    %v64 = vadd.f32 %v60, 0.0
    %v65 = vadd.f32 %v61, 0.0
    %v66 = vadd.f32 %v62, 0.0
    %s67 = sld [smem:[#allocation2 + $0x1]]
    %v68 = vstv %s67
    %vm69 = vcmp.gt.f32.partialorder %v45, %v68
    %vm70 = vcmp.gt.f32.partialorder %v46, %v68
    %vm71 = vcmp.gt.f32.partialorder %v47, %v68
    %vm72 = vcmp.gt.f32.partialorder %v48, %v68
    %v73 = vsel %vm69, 1, 0
    %v74 = vsel %vm70, 1, 0
    %v75 = vsel %vm71, 1, 0
    %v76 = vsel %vm72, 1, 0
    %v77 = vcvt.s32.f32 %v73
    %v78 = vcvt.s32.f32 %v74
    %v79 = vcvt.s32.f32 %v75
    %v80 = vcvt.s32.f32 %v76
    %v81 = vadd.f32 %v63, %v77
    %v82 = vadd.f32 %v64, %v78
    %v83 = vadd.f32 %v65, %v79
    %v84 = vadd.f32 %v66, %v80
    %s85 = sld [smem:[#allocation2 + $0x2]]
    %v86 = vstv %s85
    %vm87 = vcmp.gt.f32.partialorder %v45, %v86
    %vm88 = vcmp.gt.f32.partialorder %v46, %v86
    %vm89 = vcmp.gt.f32.partialorder %v47, %v86
    %vm90 = vcmp.gt.f32.partialorder %v48, %v86
    %v91 = vsel %vm87, 1, 0
    %v92 = vsel %vm88, 1, 0
    %v93 = vsel %vm89, 1, 0
    %v94 = vsel %vm90, 1, 0
    %v95 = vcvt.s32.f32 %v91
    %v96 = vcvt.s32.f32 %v92
    %v97 = vcvt.s32.f32 %v93
    %v98 = vcvt.s32.f32 %v94
    %v99 = vadd.f32 %v81, %v95
    %v100 = vadd.f32 %v82, %v96
    %v101 = vadd.f32 %v83, %v97
    %v102 = vadd.f32 %v84, %v98
    %s103 = sld [smem:[#allocation4 + $0x1]]
    %v104 = vstv %s103
    %v105 = vmul.f32 %v99, %v104
    %v106 = vmul.f32 %v100, %v104
    %v107 = vmul.f32 %v101, %v104
    %v108 = vmul.f32 %v102, %v104
    %109 = vst [vmem:[%s3] sm:$0xff] %v105
    %110 = vst [vmem:[%s3 + $0x8] sm:$0xff] %v106
    %111 = vst [vmem:[%s3 + $0x10] sm:$0xff] %v107
    %112 = vst [vmem:[%s3 + $0x18] sm:$0xff] %v108
    // Predicated region
    $region22: #{ltq_forward.1} parent=1 // pred_check
      _
    $region23: #{ltq_forward.1} parent=1 // pred_check_branch
      %114 = sbr.rel (0) target = $region25
    $region24: #{ltq_forward.1} parent=1 // pred_region
      _
    $region25: #{ltq_forward.1} parent=1 // pred_fallthru
      _
    // Predicated region
    $region26: #{ltq_forward.1} parent=1 // pred_check
      _
    $region27: #{ltq_forward.1} parent=1 // pred_check_branch
      %116 = sbr.rel (0) target = $region29
    $region28: #{ltq_forward.1} parent=1 // pred_region
      _
    $region29: #{ltq_forward.1} parent=1 // pred_fallthru
      _
    %117 = vsyncpa [#allocation3], 1
    %118 = vsyncpa [#allocation5], 1

</llo_original>
